<compile_context>
chip_gen: v7x
topology: tpu7x:2x2x1
jax: 0.10.0
libtpu: 0.0.40
codegen_flags: <defaults>
</compile_context>

<pallas_src>
import jax
import jax.numpy as jnp
from jax.experimental import pallas as pl
from jax.experimental.pallas import tpu as pltpu  # noqa: F401  (TPU backend)

LENGTH = 2     # inputSize == outputSize
HIDDEN = 600   # hiddenSize


def _round_up(x: int, m: int) -> int:
    return ((x + m - 1) // m) * m


def _sigmoid(z):
    # exp rides the EUP slot; exact reciprocal matches torch's 1/(1+exp(-z))
    # within normal f32 rounding.
    return pl.reciprocal(1.0 + jnp.exp(-z), approx=False)


def _mlp_kernel(x_ref, w1_ref, w2_ref, o_ref):
    x = x_ref[...]                       # (B, I), I == 2
    I = x_ref.shape[1]
    H = w1_ref.shape[1]

    # Layer 1 on the VPU: z[b, h] = sum_i x[b, i] * W1[i, h]
    # (two broadcast-FMAs across ~5 lane-dense vregs per sublane group).
    z = jnp.zeros((x.shape[0], H), jnp.float32)
    for i in range(I):                   # I is static (== 2); unrolls at trace
        z = z + x[:, i:i + 1] * w1_ref[i:i + 1, :]

    z2 = _sigmoid(z)                     # EUP exp + reciprocal

    # Layer 2 on the MXU: (B, 640) @ (640, 2), f32 accumulation.
    # TODO(synk): the torch module prints self.z3 here; side-effect print omitted.
    z3 = jnp.dot(z2, w2_ref[...], preferred_element_type=jnp.float32)

    o_ref[...] = _sigmoid(z3).astype(o_ref.dtype)


def prepare_weights(w1, w2):
    """One-time (init-time) weight preparation -- NOT on the per-call hot path.

    * HIDDEN padded 600 -> 640 (next multiple of 128): lane-dense intermediates
      and 8-aligned W2 contraction sublanes.  Extra hidden units are inert
      (zero W1 columns -> sigmoid(0)=0.5 -> zero W2 rows).
    * Input dim (2) and output dim (2) are kept at natural size; full-array
      BlockSpecs make those shapes legal and avoid ~300 KB of zero-DMA.
    """
    I, H = w1.shape
    _, O = w2.shape
    Hp = _round_up(H, 128)               # 600 -> 640
    w1p = jnp.zeros((I, Hp), jnp.float32).at[:, :H].set(w1.astype(jnp.float32))
    w2p = jnp.zeros((Hp, O), jnp.float32).at[:H, :].set(w2.astype(jnp.float32))
    return w1p, w2p


@jax.jit
def neural_network_forward(x, w1p, w2p):
    """Fused forward pass.  x: (B, I) natural shape; w1p/w2p from prepare_weights."""
    B, I = x.shape
    Ih, H = w1p.shape
    O = w2p.shape[1]
    assert I == Ih, "input dim mismatch"

    x = x.astype(jnp.float32)

    return pl.pallas_call(
        _mlp_kernel,
        out_shape=jax.ShapeDtypeStruct((B, O), jnp.float32),
        # Single block, no grid: all operands (< 200 KiB total) sit in VMEM.
        # All block shapes equal full array dims, so no (8,128) divisibility
        # requirement applies and no wrapper-side pad/slice ops are needed.
        # If batch ever grows large, add a grid over B-row blocks with
        # dimension_semantics=("parallel",) so both v7x TensorCores get work.
        in_specs=[
            pl.BlockSpec((B, I), lambda: (0, 0)),
            pl.BlockSpec((I, H), lambda: (0, 0)),
            pl.BlockSpec((H, O), lambda: (0, 0)),
        ],
        out_specs=pl.BlockSpec((B, O), lambda: (0, 0)),
    )(x, w1p, w2p)


if __name__ == "__main__":
    key = jax.random.PRNGKey(0)
    k_x, k_w1, k_w2 = jax.random.split(key, 3)

    # Small deterministic inputs consistent with the module:
    # batch of 2-element input vectors, 600 hidden units, 2 outputs.
    batch = 4
    x = jax.random.normal(k_x, (batch, LENGTH), dtype=jnp.float32)
    W1 = jax.random.normal(k_w1, (LENGTH, HIDDEN), dtype=jnp.float32)
    W2 = jax.random.normal(k_w2, (HIDDEN, LENGTH), dtype=jnp.float32)

    # One-time weight prep (off the per-call hot path).
    w1p, w2p = jax.block_until_ready(prepare_weights(W1, W2))

    o = neural_network_forward(x, w1p, w2p)
    o = jax.block_until_ready(o)

    # Pure-JAX reference check of the fused kernel.
    def _sig_ref(s):
        return 1.0 / (1.0 + jnp.exp(-s))

    ref = _sig_ref(_sig_ref(x @ W1) @ W2)
    assert o.shape == (batch, LENGTH)
    assert jnp.allclose(o, ref, atol=1e-5, rtol=1e-5), "mismatch vs reference"

    print("KERNEL_OK")
</pallas_src>

<mosaic_0001>
module attributes {stable_mosaic.version = 11 : i64} {
  func.func @_mlp_kernel(%arg0: memref<4x2xf32, #tpu.memory_space<vmem>>, %arg1: memref<2x640xf32, #tpu.memory_space<vmem>>, %arg2: memref<640x2xf32, #tpu.memory_space<vmem>>, %arg3: memref<4x2xf32, #tpu.memory_space<vmem>>) attributes {dimension_semantics = [], scalar_prefetch = 0 : i64, scratch_operands = 0 : i64, tpu.core_type = #tpu.core_type<tc>} {
    %c0 = arith.constant 0 : index
    %c0_0 = arith.constant 0 : index
    %0 = vector.load %arg0[%c0, %c0_0] : memref<4x2xf32, #tpu.memory_space<vmem>>, vector<4x2xf32>
    %cst = arith.constant 0.000000e+00 : f32
    %1 = vector.broadcast %cst : f32 to vector<4x640xf32>
    %2 = vector.extract_strided_slice %0 {offsets = [0, 0], sizes = [4, 1], strides = [1, 1]} : vector<4x2xf32> to vector<4x1xf32>
    %c0_1 = arith.constant 0 : index
    %c0_2 = arith.constant 0 : index
    %3 = vector.load %arg1[%c0_1, %c0_2] : memref<2x640xf32, #tpu.memory_space<vmem>>, vector<1x640xf32>
    %4 = vector.broadcast %2 : vector<4x1xf32> to vector<4x640xf32>
    %5 = vector.broadcast %3 : vector<1x640xf32> to vector<4x640xf32>
    %6 = arith.mulf %4, %5 : vector<4x640xf32>
    %7 = arith.addf %1, %6 : vector<4x640xf32>
    %8 = vector.extract_strided_slice %0 {offsets = [0, 1], sizes = [4, 1], strides = [1, 1]} : vector<4x2xf32> to vector<4x1xf32>
    %c1 = arith.constant 1 : index
    %c0_3 = arith.constant 0 : index
    %9 = vector.load %arg1[%c1, %c0_3] : memref<2x640xf32, #tpu.memory_space<vmem>>, vector<1x640xf32>
    %10 = vector.broadcast %8 : vector<4x1xf32> to vector<4x640xf32>
    %11 = vector.broadcast %9 : vector<1x640xf32> to vector<4x640xf32>
    %12 = arith.mulf %10, %11 : vector<4x640xf32>
    %13 = arith.addf %7, %12 : vector<4x640xf32>
    %cst_4 = arith.constant 0.000000e+00 : f32
    %14 = vector.broadcast %cst_4 : f32 to vector<4x640xf32>
    %15 = arith.subf %14, %13 : vector<4x640xf32>
    %16 = math.exp %15 : vector<4x640xf32>
    %cst_5 = arith.constant 1.000000e+00 : f32
    %17 = vector.broadcast %cst_5 : f32 to vector<4x640xf32>
    %18 = arith.addf %17, %16 : vector<4x640xf32>
    %19 = tpu.reciprocal %18 : vector<4x640xf32> -> vector<4x640xf32>
    %c0_6 = arith.constant 0 : index
    %c0_7 = arith.constant 0 : index
    %20 = vector.load %arg2[%c0_6, %c0_7] : memref<640x2xf32, #tpu.memory_space<vmem>>, vector<640x2xf32>
    %cst_8 = arith.constant dense<0.000000e+00> : vector<4x2xf32>
    %21 = tpu.matmul %19, %20, %cst_8 {dimension_numbers = #tpu.dot_dimension_numbers<[1], [0], [0], [1], [0, 0, 1, 1], [], []>} : vector<4x640xf32>, vector<640x2xf32>, vector<4x2xf32> -> vector<4x2xf32>
    %cst_9 = arith.constant 0.000000e+00 : f32
    %22 = vector.broadcast %cst_9 : f32 to vector<4x2xf32>
    %23 = arith.subf %22, %21 : vector<4x2xf32>
    %24 = math.exp %23 : vector<4x2xf32>
    %cst_10 = arith.constant 1.000000e+00 : f32
    %25 = vector.broadcast %cst_10 : f32 to vector<4x2xf32>
    %26 = arith.addf %25, %24 : vector<4x2xf32>
    %27 = tpu.reciprocal %26 : vector<4x2xf32> -> vector<4x2xf32>
    %c0_11 = arith.constant 0 : index
    %c0_12 = arith.constant 0 : index
    %28 = vector.load %arg3[%c0_11, %c0_12] : memref<4x2xf32, #tpu.memory_space<vmem>>, vector<4x2xf32>
    tpu.vector_store %arg3[%c0_11, %c0_12], %27 {strides = array<i32>} : memref<4x2xf32, #tpu.memory_space<vmem>>, vector<4x2xf32>,
    return
  }
}

</mosaic_0001>

<llo_original>
// kernel: neural_network_forward.1
$region0: #{neural_network_forward.1}
  #allocation0 [shape = 'u32[]', space=smem, size = 0x4, offset = 0x4, fixed_abs, tag = 'smem constant byte address 0x4 - core index']
  #allocation1 [shape = 'u32[144,128]{1,0:T(1,128)}', space=vmem, size = 0x12000, scoped, tag = 'internal scratch']
  %s0 = inlined_call_operand.vmem [shape: f32[4,2], index: 0, kind: input, shape index: {}]
  %s1 = inlined_call_operand.vmem [shape: f32[2,640], index: 1, kind: input, shape index: {}]
  %s2 = inlined_call_operand.vmem [shape: f32[640,2], index: 2, kind: input, shape index: {}]
  %s3 = inlined_call_operand.vmem [shape: f32[4,2], index: 3, kind: output, shape index: {}]
  %s4 = sld [smem:[#allocation0]]
  $region22: #{neural_network_forward.1} parent=0
    _
  %s6 = ssub.s32 1, %s4
  %s7 = scalar_select 0, %s6, %s4
  // Predicated region
  $region2: #{neural_network_forward.1} parent=0 // pred_check
    _
  $region3: #{neural_network_forward.1} parent=0 // pred_check_branch
    %9 = sbr.rel (0) target = $region5
  $region4: #{neural_network_forward.1} parent=0 // pred_region
    _
  $region5: #{neural_network_forward.1} parent=0 // pred_fallthru
    _
  // Predicated region
  $region6: #{neural_network_forward.1} parent=0 // pred_check
    _
  $region7: #{neural_network_forward.1} parent=0 // pred_check_branch
    %11 = sbr.rel (0) target = $region9
  $region8: #{neural_network_forward.1} parent=0 // pred_region
    _
  $region9: #{neural_network_forward.1} parent=0 // pred_fallthru
    _
  // Predicated region
  $region10: #{neural_network_forward.1} parent=0 // pred_check
    _
  $region11: #{neural_network_forward.1} parent=0 // pred_check_branch
    %13 = sbr.rel (0) target = $region13
  $region12: #{neural_network_forward.1} parent=0 // pred_region
    _
  $region13: #{neural_network_forward.1} parent=0 // pred_fallthru
    _
  %v14 = vld [vmem:[%s0] sm:$0xf]
  %v15 = vld [vmem:[%s1] ss:$2 sm:$0x1f]
  %17 = vset.pattern.permute.xlu0 0
  %18 = vperm.xlu0 %17, %v14
  %v19 = vpop.permute.xlu0 %18
  %v22 = vlaneseq
  %v23 = vshrl.u32 %v22, 7
  %v24 = vsub.s32 0, %v23
  %v25 = vrot.slane %v15, %v24
  %v26 = vlaneseq
  %v27 = vshrl.u32 %v26, 7
  %v28 = vsub.s32 1, %v27
  %v29 = vrot.slane %v15, %v28
  %v30 = vlaneseq
  %v31 = vshrl.u32 %v30, 7
  %v32 = vsub.s32 2, %v31
  %v33 = vrot.slane %v15, %v32
  %v34 = vlaneseq
  %v35 = vshrl.u32 %v34, 7
  %v36 = vsub.s32 3, %v35
  %v37 = vrot.slane %v15, %v36
  %v38 = vlaneseq
  %v39 = vshrl.u32 %v38, 7
  %v40 = vsub.s32 4, %v39
  %v41 = vrot.slane %v15, %v40
  %v47 = vmul.f32 %v19, %v25
  %v48 = vmul.f32 %v19, %v29
  %v49 = vmul.f32 %v19, %v33
  %v50 = vmul.f32 %v19, %v37
  %v51 = vmul.f32 %v19, %v41
  %v52 = vadd.f32 %v47, 0.0
  %v53 = vadd.f32 %v48, 0.0
  %v54 = vadd.f32 %v49, 0.0
  %v55 = vadd.f32 %v50, 0.0
  %v56 = vadd.f32 %v51, 0.0
  %s57 = scalar_lea.vmem %s1, 1
  %v58 = vld [vmem:[%s57] ss:$2 sm:$0x1f]
  %59 = vset.pattern.permute.xlu0 1
  %60 = vperm.xlu0 %59, %v14
  %v61 = vpop.permute.xlu0 %60
  %v64 = vlaneseq
  %v65 = vshrl.u32 %v64, 7
  %v66 = vsub.s32 0, %v65
  %v67 = vrot.slane %v58, %v66
  %v68 = vlaneseq
  %v69 = vshrl.u32 %v68, 7
  %v70 = vsub.s32 1, %v69
  %v71 = vrot.slane %v58, %v70
  %v72 = vlaneseq
  %v73 = vshrl.u32 %v72, 7
  %v74 = vsub.s32 2, %v73
  %v75 = vrot.slane %v58, %v74
  %v76 = vlaneseq
  %v77 = vshrl.u32 %v76, 7
  %v78 = vsub.s32 3, %v77
  %v79 = vrot.slane %v58, %v78
  %v80 = vlaneseq
  %v81 = vshrl.u32 %v80, 7
  %v82 = vsub.s32 4, %v81
  %v83 = vrot.slane %v58, %v82
  %v89 = vmul.f32 %v61, %v67
  %v90 = vmul.f32 %v61, %v71
  %v91 = vmul.f32 %v61, %v75
  %v92 = vmul.f32 %v61, %v79
  %v93 = vmul.f32 %v61, %v83
  %v94 = vadd.f32 %v52, %v89
  %v95 = vadd.f32 %v53, %v90
  %v96 = vadd.f32 %v54, %v91
  %v97 = vadd.f32 %v55, %v92
  %v98 = vadd.f32 %v56, %v93
  %v99 = vsub.f32 0.0, %v94
  %v100 = vsub.f32 0.0, %v95
  %v101 = vsub.f32 0.0, %v96
  %v102 = vsub.f32 0.0, %v97
  %v103 = vsub.f32 0.0, %v98
  %v104 = vmul.f32 %v99, 1.442695
  %v105 = vpow.pop %v104
  %v106 = vmul.f32 %v100, 1.442695
  %v107 = vpow.pop %v106
  %v108 = vmul.f32 %v101, 1.442695
  %v109 = vpow.pop %v108
  %v110 = vmul.f32 %v102, 1.442695
  %v111 = vpow.pop %v110
  %v112 = vmul.f32 %v103, 1.442695
  %v113 = vpow.pop %v112
  %v114 = vadd.f32 %v105, 1.0
  %v115 = vadd.f32 %v107, 1.0
  %v116 = vadd.f32 %v109, 1.0
  %v117 = vadd.f32 %v111, 1.0
  %v118 = vadd.f32 %v113, 1.0
  %v119 = vrcp.pop %v114
  %v120 = vrcp.pop %v115
  %v121 = vrcp.pop %v116
  %v122 = vrcp.pop %v117
  %v123 = vrcp.pop %v118
  %v124 = vld [vmem:[%s2] sm:$0xff]
  %v125 = vld [vmem:[%s2 + $0x8] sm:$0xff]
  %v126 = vld [vmem:[%s2 + $0x10] sm:$0xff]
  %v127 = vld [vmem:[%s2 + $0x18] sm:$0xff]
  %v128 = vld [vmem:[%s2 + $0x20] sm:$0xff]
  %v129 = vld [vmem:[%s2 + $0x28] sm:$0xff]
  %v130 = vld [vmem:[%s2 + $0x30] sm:$0xff]
  %v131 = vld [vmem:[%s2 + $0x38] sm:$0xff]
  %v132 = vld [vmem:[%s2 + $0x40] sm:$0xff]
  %v133 = vld [vmem:[%s2 + $0x48] sm:$0xff]
  %v134 = vld [vmem:[%s2 + $0x50] sm:$0xff]
  %v135 = vld [vmem:[%s2 + $0x58] sm:$0xff]
  %v136 = vld [vmem:[%s2 + $0x60] sm:$0xff]
  %v137 = vld [vmem:[%s2 + $0x68] sm:$0xff]
  %v138 = vld [vmem:[%s2 + $0x70] sm:$0xff]
  %v139 = vld [vmem:[%s2 + $0x78] sm:$0xff]
  %v140 = vld [vmem:[%s2 + $0x80] sm:$0xff]
  %v141 = vld [vmem:[%s2 + $0x88] sm:$0xff]
  %v142 = vld [vmem:[%s2 + $0x90] sm:$0xff]
  %v143 = vld [vmem:[%s2 + $0x98] sm:$0xff]
  %v144 = vld [vmem:[%s2 + $0xa0] sm:$0xff]
  %v145 = vld [vmem:[%s2 + $0xa8] sm:$0xff]
  %v146 = vld [vmem:[%s2 + $0xb0] sm:$0xff]
  %v147 = vld [vmem:[%s2 + $0xb8] sm:$0xff]
  %v148 = vld [vmem:[%s2 + $0xc0] sm:$0xff]
  %v149 = vld [vmem:[%s2 + $0xc8] sm:$0xff]
  %v150 = vld [vmem:[%s2 + $0xd0] sm:$0xff]
  %v151 = vld [vmem:[%s2 + $0xd8] sm:$0xff]
  %v152 = vld [vmem:[%s2 + $0xe0] sm:$0xff]
  %v153 = vld [vmem:[%s2 + $0xe8] sm:$0xff]
  %v154 = vld [vmem:[%s2 + $0xf0] sm:$0xff]
  %v155 = vld [vmem:[%s2 + $0xf8] sm:$0xff]
  %v156 = vld [vmem:[%s2 + $0x100] sm:$0xff]
  %v157 = vld [vmem:[%s2 + $0x108] sm:$0xff]
  %v158 = vld [vmem:[%s2 + $0x110] sm:$0xff]
  %v159 = vld [vmem:[%s2 + $0x118] sm:$0xff]
  %v160 = vld [vmem:[%s2 + $0x120] sm:$0xff]
  %v161 = vld [vmem:[%s2 + $0x128] sm:$0xff]
  %v162 = vld [vmem:[%s2 + $0x130] sm:$0xff]
  %v163 = vld [vmem:[%s2 + $0x138] sm:$0xff]
  %v164 = vld [vmem:[%s2 + $0x140] sm:$0xff]
  %v165 = vld [vmem:[%s2 + $0x148] sm:$0xff]
  %v166 = vld [vmem:[%s2 + $0x150] sm:$0xff]
  %v167 = vld [vmem:[%s2 + $0x158] sm:$0xff]
  %v168 = vld [vmem:[%s2 + $0x160] sm:$0xff]
  %v169 = vld [vmem:[%s2 + $0x168] sm:$0xff]
  %v170 = vld [vmem:[%s2 + $0x170] sm:$0xff]
  %v171 = vld [vmem:[%s2 + $0x178] sm:$0xff]
  %v172 = vld [vmem:[%s2 + $0x180] sm:$0xff]
  %v173 = vld [vmem:[%s2 + $0x188] sm:$0xff]
  %v174 = vld [vmem:[%s2 + $0x190] sm:$0xff]
  %v175 = vld [vmem:[%s2 + $0x198] sm:$0xff]
  %v176 = vld [vmem:[%s2 + $0x1a0] sm:$0xff]
  %v177 = vld [vmem:[%s2 + $0x1a8] sm:$0xff]
  %v178 = vld [vmem:[%s2 + $0x1b0] sm:$0xff]
  %v179 = vld [vmem:[%s2 + $0x1b8] sm:$0xff]
  %v180 = vld [vmem:[%s2 + $0x1c0] sm:$0xff]
  %v181 = vld [vmem:[%s2 + $0x1c8] sm:$0xff]
  %v182 = vld [vmem:[%s2 + $0x1d0] sm:$0xff]
  %v183 = vld [vmem:[%s2 + $0x1d8] sm:$0xff]
  %v184 = vld [vmem:[%s2 + $0x1e0] sm:$0xff]
  %v185 = vld [vmem:[%s2 + $0x1e8] sm:$0xff]
  %v186 = vld [vmem:[%s2 + $0x1f0] sm:$0xff]
  %v187 = vld [vmem:[%s2 + $0x1f8] sm:$0xff]
  %v188 = vld [vmem:[%s2 + $0x200] sm:$0xff]
  %v189 = vld [vmem:[%s2 + $0x208] sm:$0xff]
  %v190 = vld [vmem:[%s2 + $0x210] sm:$0xff]
  %v191 = vld [vmem:[%s2 + $0x218] sm:$0xff]
  %v192 = vld [vmem:[%s2 + $0x220] sm:$0xff]
  %v193 = vld [vmem:[%s2 + $0x228] sm:$0xff]
  %v194 = vld [vmem:[%s2 + $0x230] sm:$0xff]
  %v195 = vld [vmem:[%s2 + $0x238] sm:$0xff]
  %v196 = vld [vmem:[%s2 + $0x240] sm:$0xff]
  %v197 = vld [vmem:[%s2 + $0x248] sm:$0xff]
  %v198 = vld [vmem:[%s2 + $0x250] sm:$0xff]
  %v199 = vld [vmem:[%s2 + $0x258] sm:$0xff]
  %v200 = vld [vmem:[%s2 + $0x260] sm:$0xff]
  %v201 = vld [vmem:[%s2 + $0x268] sm:$0xff]
  %v202 = vld [vmem:[%s2 + $0x270] sm:$0xff]
  %v203 = vld [vmem:[%s2 + $0x278] sm:$0xff]
  %204 = vmatprep.subr.mxu0 0.0
  %205 = vmatpush1.msra.mxu0 %v124
  %206 = vmatprep.subr.mxu0 0.0
  %207 = vmatpush1.msra.mxu0 %v125
  %208 = vmatprep.subr.mxu0 0.0
  %209 = vmatpush1.msra.mxu0 %v126
  %210 = vmatprep.subr.mxu0 0.0
  %211 = vmatpush1.msra.mxu0 %v127
  %212 = vmatprep.subr.mxu0 0.0
  %213 = vmatpush1.msra.mxu0 %v128
  %214 = vmatprep.subr.mxu0 0.0
  %215 = vmatpush1.msra.mxu0 %v129
  %216 = vmatprep.subr.mxu0 0.0
  %217 = vmatpush1.msra.mxu0 %v130
  %218 = vmatprep.subr.mxu0 0.0
  %219 = vmatpush1.msra.mxu0 %v131
  %220 = vmatprep.subr.mxu0 0.0
  %221 = vmatpush1.msra.mxu0 %v132
  %222 = vmatprep.subr.mxu0 0.0
  %223 = vmatpush1.msra.mxu0 %v133
  %224 = vmatprep.subr.mxu0 0.0
  %225 = vmatpush1.msra.mxu0 %v134
  %226 = vmatprep.subr.mxu0 0.0
  %227 = vmatpush1.msra.mxu0 %v135
  %228 = vmatprep.subr.mxu0 0.0
  %229 = vmatpush1.msra.mxu0 %v136
  %230 = vmatprep.subr.mxu0 0.0
  %231 = vmatpush1.msra.mxu0 %v137
  %232 = vmatprep.subr.mxu0 0.0
  %233 = vmatpush1.msra.mxu0 %v138
  %234 = vmatprep.subr.mxu0 0.0
  %235 = vmatpush1.msra.mxu0 %v139
  %236 = vmatprep.subr.mxu0 0.0
  %237 = vmatpush1.msra.mxu0 %v140
  %238 = vmatprep.subr.mxu0 0.0
  %239 = vmatpush1.msra.mxu0 %v141
  %240 = vmatprep.subr.mxu0 0.0
  %241 = vmatpush1.msra.mxu0 %v142
  %242 = vmatprep.subr.mxu0 0.0
  %243 = vmatpush1.msra.mxu0 %v143
  %244 = vmatprep.subr.mxu0 0.0
  %245 = vmatpush1.msra.mxu0 %v144
  %246 = vmatprep.subr.mxu0 0.0
  %247 = vmatpush1.msra.mxu0 %v145
  %248 = vmatprep.subr.mxu0 0.0
  %249 = vmatpush1.msra.mxu0 %v146
  %250 = vmatprep.subr.mxu0 0.0
  %251 = vmatpush1.msra.mxu0 %v147
  %252 = vmatprep.subr.mxu0 0.0
  %253 = vmatpush1.msra.mxu0 %v148
  %254 = vmatprep.subr.mxu0 0.0
  %255 = vmatpush1.msra.mxu0 %v149
  %256 = vmatprep.subr.mxu0 0.0
  %257 = vmatpush1.msra.mxu0 %v150
  %258 = vmatprep.subr.mxu0 0.0
  %259 = vmatpush1.msra.mxu0 %v151
  %260 = vmatprep.subr.mxu0 0.0
  %261 = vmatpush1.msra.mxu0 %v152
  %262 = vmatprep.subr.mxu0 0.0
  %263 = vmatpush1.msra.mxu0 %v153
  %264 = vmatprep.subr.mxu0 0.0
  %265 = vmatpush1.msra.mxu0 %v154
  %266 = vmatprep.subr.mxu0 0.0
  %267 = vmatpush1.msra.mxu0 %v155
  %268 = vmatprep.mubr.f32.mxu0 %v120
  %269 = vmatmul.mubr.f32.gmra.mrb[0].mxu0 %v119
  %v270 = vpop.f32.mrb[0].mxu0
  %v271 = vadd.f32 0.0, %v270
  %v272 = vpop.f32.mrb[0].mxu0
  %273 = vdwg.mxu0
  %274 = vmatprep.subr.mxu0 0.0
  %275 = vmatpush1.msra.mxu0 %v156
  %276 = vmatprep.subr.mxu0 0.0
  %277 = vmatpush1.msra.mxu0 %v157
  %278 = vmatprep.subr.mxu0 0.0
  %279 = vmatpush1.msra.mxu0 %v158
  %280 = vmatprep.subr.mxu0 0.0
  %281 = vmatpush1.msra.mxu0 %v159
  %282 = vmatprep.subr.mxu0 0.0
  %283 = vmatpush1.msra.mxu0 %v160
  %284 = vmatprep.subr.mxu0 0.0
  %285 = vmatpush1.msra.mxu0 %v161
  %286 = vmatprep.subr.mxu0 0.0
  %287 = vmatpush1.msra.mxu0 %v162
  %288 = vmatprep.subr.mxu0 0.0
  %289 = vmatpush1.msra.mxu0 %v163
  %290 = vmatprep.subr.mxu0 0.0
  %291 = vmatpush1.msra.mxu0 %v164
  %292 = vmatprep.subr.mxu0 0.0
  %293 = vmatpush1.msra.mxu0 %v165
  %294 = vmatprep.subr.mxu0 0.0
  %295 = vmatpush1.msra.mxu0 %v166
  %296 = vmatprep.subr.mxu0 0.0
  %297 = vmatpush1.msra.mxu0 %v167
  %298 = vmatprep.subr.mxu0 0.0
  %299 = vmatpush1.msra.mxu0 %v168
  %300 = vmatprep.subr.mxu0 0.0
  %301 = vmatpush1.msra.mxu0 %v169
  %302 = vmatprep.subr.mxu0 0.0
  %303 = vmatpush1.msra.mxu0 %v170
  %304 = vmatprep.subr.mxu0 0.0
  %305 = vmatpush1.msra.mxu0 %v171
  %306 = vmatprep.subr.mxu0 0.0
  %307 = vmatpush1.msra.mxu0 %v172
  %308 = vmatprep.subr.mxu0 0.0
  %309 = vmatpush1.msra.mxu0 %v173
  %310 = vmatprep.subr.mxu0 0.0
  %311 = vmatpush1.msra.mxu0 %v174
  %312 = vmatprep.subr.mxu0 0.0
  %313 = vmatpush1.msra.mxu0 %v175
  %314 = vmatprep.subr.mxu0 0.0
  %315 = vmatpush1.msra.mxu0 %v176
  %316 = vmatprep.subr.mxu0 0.0
  %317 = vmatpush1.msra.mxu0 %v177
  %318 = vmatprep.subr.mxu0 0.0
  %319 = vmatpush1.msra.mxu0 %v178
  %320 = vmatprep.subr.mxu0 0.0
  %321 = vmatpush1.msra.mxu0 %v179
  %322 = vmatprep.subr.mxu0 0.0
  %323 = vmatpush1.msra.mxu0 %v180
  %324 = vmatprep.subr.mxu0 0.0
  %325 = vmatpush1.msra.mxu0 %v181
  %326 = vmatprep.subr.mxu0 0.0
  %327 = vmatpush1.msra.mxu0 %v182
  %328 = vmatprep.subr.mxu0 0.0
  %329 = vmatpush1.msra.mxu0 %v183
  %330 = vmatprep.subr.mxu0 0.0
  %331 = vmatpush1.msra.mxu0 %v184
  %332 = vmatprep.subr.mxu0 0.0
  %333 = vmatpush1.msra.mxu0 %v185
  %334 = vmatprep.subr.mxu0 0.0
  %335 = vmatpush1.msra.mxu0 %v186
  %336 = vmatprep.subr.mxu0 0.0
  %337 = vmatpush1.msra.mxu0 %v187
  %338 = vmatprep.mubr.f32.mxu0 %v122
  %339 = vmatmul.mubr.f32.gmra.mrb[0].mxu0 %v121
  %v340 = vpop.f32.mrb[0].mxu0
  %v341 = vadd.f32 %v271, %v340
  %v342 = vpop.f32.mrb[0].mxu0
  %343 = vdwg.mxu0
  %344 = vmatprep.subr.mxu0 0.0
  %345 = vmatpush1.msra.mxu0 %v188
  %346 = vmatprep.subr.mxu0 0.0
  %347 = vmatpush1.msra.mxu0 %v189
  %348 = vmatprep.subr.mxu0 0.0
  %349 = vmatpush1.msra.mxu0 %v190
  %350 = vmatprep.subr.mxu0 0.0
  %351 = vmatpush1.msra.mxu0 %v191
  %352 = vmatprep.subr.mxu0 0.0
  %353 = vmatpush1.msra.mxu0 %v192
  %354 = vmatprep.subr.mxu0 0.0
  %355 = vmatpush1.msra.mxu0 %v193
  %356 = vmatprep.subr.mxu0 0.0
  %357 = vmatpush1.msra.mxu0 %v194
  %358 = vmatprep.subr.mxu0 0.0
  %359 = vmatpush1.msra.mxu0 %v195
  %360 = vmatprep.subr.mxu0 0.0
  %361 = vmatpush1.msra.mxu0 %v196
  %362 = vmatprep.subr.mxu0 0.0
  %363 = vmatpush1.msra.mxu0 %v197
  %364 = vmatprep.subr.mxu0 0.0
  %365 = vmatpush1.msra.mxu0 %v198
  %366 = vmatprep.subr.mxu0 0.0
  %367 = vmatpush1.msra.mxu0 %v199
  %368 = vmatprep.subr.mxu0 0.0
  %369 = vmatpush1.msra.mxu0 %v200
  %370 = vmatprep.subr.mxu0 0.0
  %371 = vmatpush1.msra.mxu0 %v201
  %372 = vmatprep.subr.mxu0 0.0
  %373 = vmatpush1.msra.mxu0 %v202
  %374 = vmatprep.subr.mxu0 0.0
  %375 = vmatpush1.msra.mxu0 %v203
  %376 = vmatprep.subr.mxu0 0.0
  %377 = vmatpush1.msra.mxu0 0.0
  %378 = vmatprep.subr.mxu0 0.0
  %379 = vmatpush1.msra.mxu0 0.0
  %380 = vmatprep.subr.mxu0 0.0
  %381 = vmatpush1.msra.mxu0 0.0
  %382 = vmatprep.subr.mxu0 0.0
  %383 = vmatpush1.msra.mxu0 0.0
  %384 = vmatprep.subr.mxu0 0.0
  %385 = vmatpush1.msra.mxu0 0.0
  %386 = vmatprep.subr.mxu0 0.0
  %387 = vmatpush1.msra.mxu0 0.0
  %388 = vmatprep.subr.mxu0 0.0
  %389 = vmatpush1.msra.mxu0 0.0
  %390 = vmatprep.subr.mxu0 0.0
  %391 = vmatpush1.msra.mxu0 0.0
  %392 = vmatprep.subr.mxu0 0.0
  %393 = vmatpush1.msra.mxu0 0.0
  %394 = vmatprep.subr.mxu0 0.0
  %395 = vmatpush1.msra.mxu0 0.0
  %396 = vmatprep.subr.mxu0 0.0
  %397 = vmatpush1.msra.mxu0 0.0
  %398 = vmatprep.subr.mxu0 0.0
  %399 = vmatpush1.msra.mxu0 0.0
  %400 = vmatprep.subr.mxu0 0.0
  %401 = vmatpush1.msra.mxu0 0.0
  %402 = vmatprep.subr.mxu0 0.0
  %403 = vmatpush1.msra.mxu0 0.0
  %404 = vmatprep.subr.mxu0 0.0
  %405 = vmatpush1.msra.mxu0 0.0
  %406 = vmatprep.subr.mxu0 0.0
  %407 = vmatpush1.msra.mxu0 0.0
  %408 = vmatprep.mubr.f32.mxu0 0.0
  %409 = vmatmul.mubr.f32.gmra.mrb[0].mxu0 %v123
  %v410 = vpop.f32.mrb[0].mxu0
  %v411 = vadd.f32 %v341, %v410
  %v412 = vpop.f32.mrb[0].mxu0
  %413 = vdwg.mxu0
  %v414 = vsub.f32 0.0, %v411
  %v415 = vmul.f32 %v414, 1.442695
  %v416 = vpow.pop %v415
  %v417 = vadd.f32 %v416, 1.0
  %v418 = vrcp.pop %v417
  %vm419 = vcmask 11264
  %420 = vst.msk [vmem:[%s3] sm:$0xf] %vm419, %v418
  // Predicated region
  $region14: #{neural_network_forward.1} parent=0 // pred_check
    _
  $region15: #{neural_network_forward.1} parent=0 // pred_check_branch
    %422 = sbr.rel (0) target = $region17
  $region16: #{neural_network_forward.1} parent=0 // pred_region
    _
  $region17: #{neural_network_forward.1} parent=0 // pred_fallthru
    _
  // Predicated region
  $region18: #{neural_network_forward.1} parent=0 // pred_check
    _
  $region19: #{neural_network_forward.1} parent=0 // pred_check_branch
    %424 = sbr.rel (0) target = $region21
  $region20: #{neural_network_forward.1} parent=0 // pred_region
    _
  $region21: #{neural_network_forward.1} parent=0 // pred_fallthru
    _

</llo_original>
